<compile_context>
chip_gen: v6e
topology: v6e:2x2x1
jax: 0.10.0
libtpu: 0.0.40
codegen_flags: <defaults>
</compile_context>

<pallas_src>
import functools

import jax
import jax.numpy as jnp
from jax import lax
from jax.experimental import pallas as pl
from jax.experimental.pallas import tpu as pltpu


def _round_up(x, m):
    return ((x + m - 1) // m) * m


def _clamp_tile(target, n):
    """Largest power-of-two multiple of 128 that is <= target and <= max(n, 128)."""
    t = target
    while t > max(n, 128):
        t //= 2
    return max(t, 128)


def _gcn_mc_kernel(a_ref, xw_ref, *rest, residual, is_normalize):
    if residual:
        xres_ref, o_ref, acc_ref = rest
    else:
        o_ref, acc_ref = rest

    k = pl.program_id(1)

    @pl.when(k == 0)
    def _():
        acc_ref[...] = jnp.zeros_like(acc_ref)

    # Aggregation partial sum: acc += A[row-tile, k-tile] @ xw[k-tile, :].
    # A is int8 in HBM (exact for 0/1 adjacency); the cheap int8->bf16 convert
    # keeps the matmul on the native bf16 MXU path with f32 accumulation.
    acc_ref[...] += jnp.dot(
        a_ref[...].astype(jnp.bfloat16),
        xw_ref[...],
        preferred_element_type=jnp.float32,
    )

    @pl.when(k == pl.num_programs(1) - 1)
    def _():
        h = acc_ref[...]

        # Dropout (eval mode) -> identity.

        # ReLU (VPU).
        h = jnp.maximum(h, 0.0)

        if is_normalize:
            # F.normalize(h, p=2, dim=1): row-wise L2 normalize, eps-clamped.
            # rsqrt on the clamped sum of squares (EUP) + one VPU multiply.
            sumsq = jnp.sum(h * h, axis=-1, keepdims=True)
            h = h * lax.rsqrt(jnp.maximum(sumsq, 1e-24))

        if residual:
            # h += h_in (pre-aggregation node features; F_in == F_out).
            h = h + xres_ref[...]

        o_ref[...] = h.astype(o_ref.dtype)


def gcn_mc_forward(adj, x, w, *, residual=True, is_normalize=False):
    """GCN_MC forward.

    adj: [N, N] dense adjacency, adj[i, j] = 1 iff edge j -> i.  Any dtype
         holding 0/1 values; callers that want to skip the wrapper-side
         cast/pad HBM pass should store it pre-padded as int8.
    x:   [N, F_in] node features.
    w:   [F_out, F_in] Linear weight (bias=False).
    returns: [N, F_out] float32
    """
    N, f_in = x.shape
    f_out = w.shape[0]
    if w.shape[1] != f_in:
        raise ValueError("weight / feature shape mismatch")
    if residual and f_in != f_out:
        raise ValueError("residual requires in_channels == out_channels")

    # ---- tile sizes ---------------------------------------------------------
    TM_TARGET = 1024   # output-row tile ("parallel")
    TK_TARGET = 2048   # adjacency-reduction tile ("arbitrary", innermost)
    n_pad = _round_up(N, 128)
    tm = _clamp_tile(TM_TARGET, n_pad)
    tk = _clamp_tile(TK_TARGET, n_pad)
    n_pad = _round_up(N, max(tm, tk))        # tm | tk | n_pad (powers of two * 128)
    f_out_pad = _round_up(f_out, 128)

    # ---- reassociation: (A @ x) @ W.T == A @ (x @ W.T) ----------------------
    # The tiny [N, F_in] x [F_in, F_out] GEMM runs once in XLA; the kernel then
    # only streams its bf16 result against the adjacency.
    xw = jnp.dot(x.astype(jnp.float32), jnp.transpose(w).astype(jnp.float32),
                 preferred_element_type=jnp.float32)
    xw_p = jnp.pad(
        xw, ((0, n_pad - N), (0, f_out_pad - f_out))
    ).astype(jnp.bfloat16)

    # ---- adjacency: int8 storage (exact for 0/1 entries) --------------------
    # Skip the extra HBM pad/cast pass when the caller already conforms.
    if adj.dtype == jnp.int8 and adj.shape == (n_pad, n_pad):
        adj_p = adj
    else:
        adj_p = jnp.pad(adj.astype(jnp.int8),
                        ((0, n_pad - N), (0, n_pad - N)))

    operands = [adj_p, xw_p]
    in_specs = [
        # A row/col tile (dominant HBM stream).
        pl.BlockSpec((tm, tk), lambda i, k: (i, k)),
        # xw reduction tile (indexed by k), bf16.
        pl.BlockSpec((tk, f_out_pad), lambda i, k: (k, 0)),
    ]
    if residual:
        # Residual stream (pre-aggregation features), row-indexed, f32.
        xres_p = jnp.pad(x.astype(jnp.float32),
                         ((0, n_pad - N), (0, f_out_pad - f_in)))
        operands.append(xres_p)
        in_specs.append(pl.BlockSpec((tm, f_out_pad), lambda i, k: (i, 0)))

    flops = 2 * n_pad * n_pad * f_out_pad
    bytes_accessed = (
        n_pad * n_pad                                        # A, int8
        + (n_pad // tm) * n_pad * f_out_pad * 2              # xw re-stream, bf16
        + (n_pad * f_out_pad * 4 if residual else 0)         # residual, f32
        + n_pad * f_out_pad * 4                              # output, f32
    )

    kernel = functools.partial(
        _gcn_mc_kernel, residual=residual, is_normalize=is_normalize
    )

    out_p = pl.pallas_call(
        kernel,
        out_shape=jax.ShapeDtypeStruct((n_pad, f_out_pad), jnp.float32),
        grid=(n_pad // tm, n_pad // tk),
        in_specs=in_specs,
        out_specs=pl.BlockSpec((tm, f_out_pad), lambda i, k: (i, 0)),
        scratch_shapes=[pltpu.VMEM((tm, f_out_pad), jnp.float32)],
        compiler_params=pltpu.CompilerParams(
            dimension_semantics=("parallel", "arbitrary"),
            # Explicit scoped-VMEM limit: ~7.5 MiB of buffers needed at
            # tm=1024/tk=2048; 32 MiB fits v5e (128 MiB phys) and v7x (64 MiB
            # phys) while overriding v5e's 16 MiB scoped default.
            vmem_limit_bytes=32 * 1024 * 1024,
        ),
        cost_estimate=pl.CostEstimate(
            flops=flops,
            transcendentals=n_pad if is_normalize else 0,
            bytes_accessed=bytes_accessed,
        ),
    )(*operands)

    return out_p[:N, :f_out]


def _reference(adj, x, w, *, residual=True, is_normalize=False):
    agg = adj.astype(jnp.float32) @ x
    h = agg @ w.T
    h = jnp.maximum(h, 0.0)
    if is_normalize:
        h = h / jnp.maximum(
            jnp.sqrt(jnp.sum(h * h, axis=-1, keepdims=True)), 1e-12
        )
    if residual:
        h = h + x
    return h


if __name__ == "__main__":
    # Small deterministic example: 8 nodes, in_channels = out_channels = 32.
    N = 8
    in_channels = 32
    out_channels = 32

    key = jax.random.PRNGKey(0)
    k_x, k_w = jax.random.split(key)

    # Node features.
    x = jax.random.normal(k_x, (N, in_channels), dtype=jnp.float32)

    # Deterministic Linear weight (PyTorch kaiming-uniform-ish range).
    bound = 1.0 / (in_channels ** 0.5)
    w = jax.random.uniform(
        k_w, (out_channels, in_channels),
        minval=-bound, maxval=bound, dtype=jnp.float32,
    )

    # Deterministic ring graph with self-loops: edges i->i and i->(i+1)%N.
    # adj[dst, src] = 1.
    eye = jnp.eye(N, dtype=jnp.float32)
    ring = jnp.roll(eye, shift=1, axis=0)  # dst = (src + 1) % N
    adj = eye + ring

    for residual, is_norm in ((True, False), (True, True), (False, True)):
        out = gcn_mc_forward(adj, x, w, residual=residual, is_normalize=is_norm)
        out = jax.block_until_ready(out)
        ref = _reference(adj, x, w, residual=residual, is_normalize=is_norm)
        assert out.shape == (N, out_channels)
        # bf16 feature streaming -> loosened tolerance vs the f32 reference.
        assert jnp.allclose(out, ref, atol=2e-2, rtol=2e-2), (
            f"mismatch vs reference (residual={residual}, is_normalize={is_norm})"
        )

    print("KERNEL_OK")
</pallas_src>

<mosaic_0001>
module attributes {stable_mosaic.version = 11 : i64} {
  func.func @_gcn_mc_kernel(%arg0: i32, %arg1: i32, %arg2: memref<128x128xi8, #tpu.memory_space<vmem>>, %arg3: memref<128x128xbf16, #tpu.memory_space<vmem>>, %arg4: memref<128x128xf32, #tpu.memory_space<vmem>>, %arg5: memref<128x128xf32, #tpu.memory_space<vmem>>, %arg6: memref<128x128xf32, #tpu.memory_space<vmem>>) attributes {dimension_semantics = [#tpu.dimension_semantics<parallel>, #tpu.dimension_semantics<arbitrary>], iteration_bounds = array<i64: 1, 1>, scalar_prefetch = 0 : i64, scratch_operands = 1 : i64, tpu.core_type = #tpu.core_type<tc>, window_params = [{transform_indices = @transform_0, window_bounds = array<i64: 128, 128>}, {transform_indices = @transform_1, window_bounds = array<i64: 128, 128>}, {transform_indices = @transform_2, window_bounds = array<i64: 128, 128>}, {transform_indices = @transform_3, window_bounds = array<i64: 128, 128>}]} {
    %c0_i32 = arith.constant 0 : i32
    %0 = arith.cmpi eq, %arg1, %c0_i32 : i32
    %1 = arith.extui %0 : i1 to i32
    %c0_i32_0 = arith.constant 0 : i32
    %2 = arith.cmpi ne, %1, %c0_i32_0 : i32
    scf.if %2 {
      %cst_10 = arith.constant 0.000000e+00 : f32
      %13 = vector.broadcast %cst_10 : f32 to vector<128x128xf32>
      %c0_11 = arith.constant 0 : index
      %c0_12 = arith.constant 0 : index
      %14 = vector.load %arg6[%c0_11, %c0_12] : memref<128x128xf32, #tpu.memory_space<vmem>>, vector<128x128xf32>
      tpu.vector_store %arg6[%c0_11, %c0_12], %13 {strides = array<i32>} : memref<128x128xf32, #tpu.memory_space<vmem>>, vector<128x128xf32>,
    } else {
    }
    %c0 = arith.constant 0 : index
    %c0_1 = arith.constant 0 : index
    %3 = vector.load %arg6[%c0, %c0_1] : memref<128x128xf32, #tpu.memory_space<vmem>>, vector<128x128xf32>
    %c0_2 = arith.constant 0 : index
    %c0_3 = arith.constant 0 : index
    %4 = vector.load %arg2[%c0_2, %c0_3] : memref<128x128xi8, #tpu.memory_space<vmem>>, vector<128x128xi8>
    %5 = arith.sitofp %4 : vector<128x128xi8> to vector<128x128xbf16>
    %c0_4 = arith.constant 0 : index
    %c0_5 = arith.constant 0 : index
    %6 = vector.load %arg3[%c0_4, %c0_5] : memref<128x128xbf16, #tpu.memory_space<vmem>>, vector<128x128xbf16>
    %cst = arith.constant dense<0.000000e+00> : vector<128x128xf32>
    %7 = tpu.matmul %5, %6, %cst {dimension_numbers = #tpu.dot_dimension_numbers<[1], [0], [0], [1], [0, 0, 1, 1], [], []>} : vector<128x128xbf16>, vector<128x128xbf16>, vector<128x128xf32> -> vector<128x128xf32>
    %8 = arith.addf %3, %7 : vector<128x128xf32>
    %c0_6 = arith.constant 0 : index
    %c0_7 = arith.constant 0 : index
    %9 = vector.load %arg6[%c0_6, %c0_7] : memref<128x128xf32, #tpu.memory_space<vmem>>, vector<128x128xf32>
    tpu.vector_store %arg6[%c0_6, %c0_7], %8 {strides = array<i32>} : memref<128x128xf32, #tpu.memory_space<vmem>>, vector<128x128xf32>,
    %c0_i32_8 = arith.constant 0 : i32
    %10 = arith.cmpi eq, %arg1, %c0_i32_8 : i32
    %11 = arith.extui %10 : i1 to i32
    %c0_i32_9 = arith.constant 0 : i32
    %12 = arith.cmpi ne, %11, %c0_i32_9 : i32
    scf.if %12 {
      %c0_10 = arith.constant 0 : index
      %c0_11 = arith.constant 0 : index
      %13 = vector.load %arg6[%c0_10, %c0_11] : memref<128x128xf32, #tpu.memory_space<vmem>>, vector<128x128xf32>
      %cst_12 = arith.constant 0.000000e+00 : f32
      %14 = vector.broadcast %cst_12 : f32 to vector<128x128xf32>
      %15 = arith.maximumf %13, %14 : vector<128x128xf32>
      %c0_13 = arith.constant 0 : index
      %c0_14 = arith.constant 0 : index
      %16 = vector.load %arg4[%c0_13, %c0_14] : memref<128x128xf32, #tpu.memory_space<vmem>>, vector<128x128xf32>
      %17 = arith.addf %15, %16 : vector<128x128xf32>
      %c0_15 = arith.constant 0 : index
      %c0_16 = arith.constant 0 : index
      %18 = vector.load %arg5[%c0_15, %c0_16] : memref<128x128xf32, #tpu.memory_space<vmem>>, vector<128x128xf32>
      tpu.vector_store %arg5[%c0_15, %c0_16], %17 {strides = array<i32>} : memref<128x128xf32, #tpu.memory_space<vmem>>, vector<128x128xf32>,
    } else {
    }
    return
  }
  func.func @transform_0(%arg0: i32, %arg1: i32) -> (i32, i32) {
    %c0_i32 = arith.constant 0 : i32
    return %arg0, %arg1 : i32, i32
  }
  func.func @transform_1(%arg0: i32, %arg1: i32) -> (i32, i32) {
    %c0_i32 = arith.constant 0 : i32
    %c0_i32_0 = arith.constant 0 : i32
    return %arg1, %c0_i32 : i32, i32
  }
  func.func @transform_2(%arg0: i32, %arg1: i32) -> (i32, i32) {
    %c0_i32 = arith.constant 0 : i32
    %c0_i32_0 = arith.constant 0 : i32
    return %arg0, %c0_i32 : i32, i32
  }
  func.func @transform_3(%arg0: i32, %arg1: i32) -> (i32, i32) {
    %c0_i32 = arith.constant 0 : i32
    %c0_i32_0 = arith.constant 0 : i32
    return %arg0, %c0_i32 : i32, i32
  }
}

</mosaic_0001>

<llo_original>
// kernel: tpu_custom_call.1
$region0: #{tpu_custom_call.1}
  #allocation0 [shape = 'u32[]', space=smem, size = 0x4, offset = 0x4, fixed_abs, tag = 'smem constant byte address 0x4 - core index']
  #allocation1 [shape = 'u32[144,128]{1,0:T(1,128)}', space=vmem, size = 0x12000, scoped, tag = 'internal scratch']
  #allocation2 [shape = 'f32[128,128]{1,0:T(8,128)}', space=vmem, size = 0x10000, scoped, tag = 'scratch operand']
  %s0 = inlined_call_operand.hbm [shape: s8[128,128], index: 0, kind: input, shape index: {}]
  %s1 = inlined_call_operand.hbm [shape: bf16[128,128], index: 1, kind: input, shape index: {}]
  %s2 = inlined_call_operand.hbm [shape: f32[128,128], index: 2, kind: input, shape index: {}]
  %s3 = inlined_call_operand.hbm [shape: f32[128,128], index: 3, kind: output, shape index: {}]
  %s4 = sld [smem:[#allocation0]]
  $region42: #{tpu_custom_call.1} parent=0
    _
  %s6 = ssub.s32 1, %s4
  %s7 = scalar_select 0, %s6, %s4
  $region1: #{tpu_custom_call.1} parent=0
    #allocation3 [shape = 'u8[16384]{0}', space=vmem, size = 0x4000, scoped, tag = 'input window, operand 0, single buffered']
    #allocation4 [shape = 's32[1]{0}', space=sflag, size = 0x4, scoped, tag = 'scoped memory for tpu_custom_call.1']
    #allocation5 [shape = 's32[1]{0}', space=sflag, size = 0x4, scoped, tag = 'scoped memory for tpu_custom_call.1']
    #allocation6 [shape = 'u8[32768]{0}', space=vmem, size = 0x8000, scoped, tag = 'input window, operand 1, single buffered']
    #allocation7 [shape = 's32[1]{0}', space=sflag, size = 0x4, scoped, tag = 'scoped memory for tpu_custom_call.1']
    #allocation8 [shape = 'u8[65536]{0}', space=vmem, size = 0x10000, scoped, tag = 'input window, operand 2, single buffered']
    #allocation9 [shape = 'u8[65536]{0}', space=vmem, size = 0x10000, scoped, tag = 'output window, operand 0, single buffered']
    %8 = vsyncpa [#allocation4], 0
    %9 = vsyncpa [#allocation7], 0
    %10 = vsyncpa [#allocation5], 0
    // Predicated region
    $region2: #{tpu_custom_call.1} parent=1 // pred_check
      _
    $region3: #{tpu_custom_call.1} parent=1 // pred_check_branch
      %12 = sbr.rel (0) target = $region5
    $region4: #{tpu_custom_call.1} parent=1 // pred_region
      %s14 = ssub.s32 512, 512
      %15 = vsyncadd [#allocation4], %s14
      %s16 = sshll.u32 [#allocation3], 4
      %s17 = int_to_ptr.vmem [resolvable:$true] %s16
      %22 = dma.hbm_to_vmem [thread:$0]  %s0, 512, %s17, [#allocation4], 128, 128, 8
    $region5: #{tpu_custom_call.1} parent=1 // pred_fallthru
      _
    // Predicated region
    $region6: #{tpu_custom_call.1} parent=1 // pred_check
      _
    $region7: #{tpu_custom_call.1} parent=1 // pred_check_branch
      %24 = sbr.rel (0) target = $region9
    $region8: #{tpu_custom_call.1} parent=1 // pred_region
      %s26 = ssub.s32 1024, 1024
      %27 = vsyncadd [#allocation7], %s26
      %s28 = sshll.u32 [#allocation6], 4
      %s29 = int_to_ptr.vmem [resolvable:$true] %s28
      %34 = dma.hbm_to_vmem [thread:$0]  %s1, 1024, %s29, [#allocation7], 64, 64, 4
    $region9: #{tpu_custom_call.1} parent=1 // pred_fallthru
      _
    // Predicated region
    $region10: #{tpu_custom_call.1} parent=1 // pred_check
      _
    $region11: #{tpu_custom_call.1} parent=1 // pred_check_branch
      %36 = sbr.rel (0) target = $region13
    $region12: #{tpu_custom_call.1} parent=1 // pred_region
      %s38 = ssub.s32 2048, 2048
      %39 = vsyncadd [#allocation7], %s38
      %s40 = sshll.u32 [#allocation8], 4
      %s41 = int_to_ptr.vmem [resolvable:$true] %s40
      %46 = dma.hbm_to_vmem [thread:$0]  %s2, 2048, %s41, [#allocation7], 128, 128, 8
    $region13: #{tpu_custom_call.1} parent=1 // pred_fallthru
      _
    // Predicated region
    $region14: #{tpu_custom_call.1} parent=1 // pred_check
      _
    $region15: #{tpu_custom_call.1} parent=1 // pred_check_branch
      %48 = sbr.rel (0) target = $region17
    $region16: #{tpu_custom_call.1} parent=1 // pred_region
      %49 = dma.done [#allocation4], 512
    $region17: #{tpu_custom_call.1} parent=1 // pred_fallthru
      _
    // Predicated region
    $region18: #{tpu_custom_call.1} parent=1 // pred_check
      _
    $region19: #{tpu_custom_call.1} parent=1 // pred_check_branch
      %51 = sbr.rel (0) target = $region21
    $region20: #{tpu_custom_call.1} parent=1 // pred_region
      %52 = dma.done [#allocation7], 1024
    $region21: #{tpu_custom_call.1} parent=1 // pred_fallthru
      _
    // Predicated region
    $region22: #{tpu_custom_call.1} parent=1 // pred_check
      _
    $region23: #{tpu_custom_call.1} parent=1 // pred_check_branch
      %54 = sbr.rel (0) target = $region25
    $region24: #{tpu_custom_call.1} parent=1 // pred_region
      %55 = dma.done [#allocation7], 2048
    $region25: #{tpu_custom_call.1} parent=1 // pred_fallthru
      _
    %p57 = scmp.eq.s32.totalorder 0, 0
    // Predicated region
    $region26: #{tpu_custom_call.1} parent=1 // pred_check
      %p58 = pneg %p57
    $region27: #{tpu_custom_call.1} parent=1 // pred_check_branch
      %60 = sbr.rel (%p58) target = $region29
    $region28: #{tpu_custom_call.1} parent=1 // pred_region
      %61 = vst [vmem:[#allocation2] sm:$0xff] 0.0
      %62 = vst [vmem:[#allocation2 + $0x8] sm:$0xff] 0.0
      %63 = vst [vmem:[#allocation2 + $0x10] sm:$0xff] 0.0
      %64 = vst [vmem:[#allocation2 + $0x18] sm:$0xff] 0.0
      %65 = vst [vmem:[#allocation2 + $0x20] sm:$0xff] 0.0
      %66 = vst [vmem:[#allocation2 + $0x28] sm:$0xff] 0.0
      %67 = vst [vmem:[#allocation2 + $0x30] sm:$0xff] 0.0
      %68 = vst [vmem:[#allocation2 + $0x38] sm:$0xff] 0.0
      %69 = vst [vmem:[#allocation2 + $0x40] sm:$0xff] 0.0
      %70 = vst [vmem:[#allocation2 + $0x48] sm:$0xff] 0.0
      %71 = vst [vmem:[#allocation2 + $0x50] sm:$0xff] 0.0
      %72 = vst [vmem:[#allocation2 + $0x58] sm:$0xff] 0.0
      %73 = vst [vmem:[#allocation2 + $0x60] sm:$0xff] 0.0
      %74 = vst [vmem:[#allocation2 + $0x68] sm:$0xff] 0.0
      %75 = vst [vmem:[#allocation2 + $0x70] sm:$0xff] 0.0
      %76 = vst [vmem:[#allocation2 + $0x78] sm:$0xff] 0.0
    $region29: #{tpu_custom_call.1} parent=1 // pred_fallthru
      _
    %v77 = vld [vmem:[#allocation2] sm:$0xff]
    %v78 = vld [vmem:[#allocation2 + $0x8] sm:$0xff]
    %v79 = vld [vmem:[#allocation2 + $0x10] sm:$0xff]
    %v80 = vld [vmem:[#allocation2 + $0x18] sm:$0xff]
    %v81 = vld [vmem:[#allocation2 + $0x20] sm:$0xff]
    %v82 = vld [vmem:[#allocation2 + $0x28] sm:$0xff]
    %v83 = vld [vmem:[#allocation2 + $0x30] sm:$0xff]
    %v84 = vld [vmem:[#allocation2 + $0x38] sm:$0xff]
    %v85 = vld [vmem:[#allocation2 + $0x40] sm:$0xff]
    %v86 = vld [vmem:[#allocation2 + $0x48] sm:$0xff]
    %v87 = vld [vmem:[#allocation2 + $0x50] sm:$0xff]
    %v88 = vld [vmem:[#allocation2 + $0x58] sm:$0xff]
    %v89 = vld [vmem:[#allocation2 + $0x60] sm:$0xff]
    %v90 = vld [vmem:[#allocation2 + $0x68] sm:$0xff]
    %v91 = vld [vmem:[#allocation2 + $0x70] sm:$0xff]
    %v92 = vld [vmem:[#allocation2 + $0x78] sm:$0xff]
    %v93 = vld [vmem:[#allocation3] sm:$0xff]
    %v94 = vld [vmem:[#allocation3 + $0x8] sm:$0xff]
    %v95 = vld [vmem:[#allocation3 + $0x10] sm:$0xff]
    %v96 = vld [vmem:[#allocation3 + $0x18] sm:$0xff]
    %v97 = vunpack.c.l.s8.bf16 %v93
    %v98 = vunpack.c.h.s8.bf16 %v93
    %v99 = vunpack.c.l.s8.bf16 %v94
    %v100 = vunpack.c.h.s8.bf16 %v94
    %v101 = vunpack.c.l.s8.bf16 %v95
    %v102 = vunpack.c.h.s8.bf16 %v95
    %v103 = vunpack.c.l.s8.bf16 %v96
    %v104 = vunpack.c.h.s8.bf16 %v96
    %v105 = vld [vmem:[#allocation6] sm:$0xf]
    %v106 = vld [vmem:[#allocation6 + $0x4] sm:$0xf]
    %v107 = vld [vmem:[#allocation6 + $0x8] sm:$0xf]
    %v108 = vld [vmem:[#allocation6 + $0xc] sm:$0xf]
    %v109 = vld [vmem:[#allocation6 + $0x10] sm:$0xf]
    %v110 = vld [vmem:[#allocation6 + $0x14] sm:$0xf]
    %v111 = vld [vmem:[#allocation6 + $0x18] sm:$0xf]
    %v112 = vld [vmem:[#allocation6 + $0x1c] sm:$0xf]
    %v113 = vld [vmem:[#allocation6 + $0x20] sm:$0xf]
    %v114 = vld [vmem:[#allocation6 + $0x24] sm:$0xf]
    %v115 = vld [vmem:[#allocation6 + $0x28] sm:$0xf]
    %v116 = vld [vmem:[#allocation6 + $0x2c] sm:$0xf]
    %v117 = vld [vmem:[#allocation6 + $0x30] sm:$0xf]
    %v118 = vld [vmem:[#allocation6 + $0x34] sm:$0xf]
    %v119 = vld [vmem:[#allocation6 + $0x38] sm:$0xf]
    %v120 = vld [vmem:[#allocation6 + $0x3c] sm:$0xf]
    %v137 = vunpack.c.l.b16 %v105
    %v138 = vunpack.c.l.b16 %v106
    %v139 = vunpack.c.l.b16 %v107
    %v140 = vunpack.c.l.b16 %v108
    %v141 = vunpack.c.l.b16 %v109
    %v142 = vunpack.c.l.b16 %v110
    %v143 = vunpack.c.l.b16 %v111
    %v144 = vunpack.c.l.b16 %v112
    %v145 = vunpack.c.l.b16 %v113
    %v146 = vunpack.c.l.b16 %v114
    %v147 = vunpack.c.l.b16 %v115
    %v148 = vunpack.c.l.b16 %v116
    %v149 = vunpack.c.l.b16 %v117
    %v150 = vunpack.c.l.b16 %v118
    %v151 = vunpack.c.l.b16 %v119
    %v152 = vunpack.c.l.b16 %v120
    %v153 = vpack.c.b16 %v138, %v137
    %v154 = vpack.c.b16 %v140, %v139
    %v155 = vpack.c.b16 %v142, %v141
    %v156 = vpack.c.b16 %v144, %v143
    %v157 = vpack.c.b16 %v146, %v145
    %v158 = vpack.c.b16 %v148, %v147
    %v159 = vpack.c.b16 %v150, %v149
    %v160 = vpack.c.b16 %v152, %v151
    %169 = vmatprep.subr.bf16.mxu0 0
    %170 = vmatpush1.bf16.msra.mxu0 %v160
    %171 = vmatprep.subr.bf16.mxu0 0
    %172 = vmatpush1.bf16.msra.mxu0 %v159
    %173 = vmatprep.subr.bf16.mxu0 0
    %174 = vmatpush1.bf16.msra.mxu0 %v158
    %175 = vmatprep.subr.bf16.mxu0 0
    %176 = vmatpush1.bf16.msra.mxu0 %v157
    %177 = vmatprep.subr.bf16.mxu0 0
    %178 = vmatpush1.bf16.msra.mxu0 %v156
    %179 = vmatprep.subr.bf16.mxu0 0
    %180 = vmatpush1.bf16.msra.mxu0 %v155
    %181 = vmatprep.subr.bf16.mxu0 0
    %182 = vmatpush1.bf16.msra.mxu0 %v154
    %183 = vmatprep.subr.bf16.mxu0 0
    %184 = vmatpush1.bf16.msra.mxu0 %v153
    %185 = vmatprep.subr.bf16.mxu0 0
    %186 = vmatpush2.bf16.msra.mxu0 0
    %187 = vmatprep.subr.bf16.mxu0 0
    %188 = vmatpush2.bf16.msra.mxu0 0
    %189 = vmatprep.subr.bf16.mxu0 0
    %190 = vmatpush2.bf16.msra.mxu0 0
    %191 = vmatprep.subr.bf16.mxu0 0
    %192 = vmatpush2.bf16.msra.mxu0 0
    %193 = vmatprep.subr.bf16.mxu0 0
    %194 = vmatpush2.bf16.msra.mxu0 0
    %195 = vmatprep.subr.bf16.mxu0 0
    %196 = vmatpush2.bf16.msra.mxu0 0
    %197 = vmatprep.subr.bf16.mxu0 0
    %198 = vmatpush2.bf16.msra.mxu0 0
    %199 = vmatprep.subr.bf16.mxu0 0
    %200 = vmatpush2.bf16.msra.mxu0 0
    %201 = vmatprep.mubr.bf16.mxu0 0
    %202 = vmatmul.mubr.bf16.gmra.mxu0 %v97
    %v203 = vpop.f32.mrf.mxu0
    %v204 = vadd.f32 0.0, %v203
    %v205 = vpop.f32.mrf.mxu0
    %v206 = vpop.f32.mrf.mxu0
    %v207 = vadd.f32 0.0, %v206
    %v208 = vpop.f32.mrf.mxu0
    %209 = vmatprep.mubr.bf16.mxu0 0
    %210 = vmatmul.mubr.bf16.gmra.mxu0 %v98
    %v211 = vpop.f32.mrf.mxu0
    %v212 = vadd.f32 0.0, %v211
    %v213 = vpop.f32.mrf.mxu0
    %v214 = vpop.f32.mrf.mxu0
    %v215 = vadd.f32 0.0, %v214
    %v216 = vpop.f32.mrf.mxu0
    %217 = vmatprep.mubr.bf16.mxu0 0
    %218 = vmatmul.mubr.bf16.gmra.mxu0 %v99
    %v219 = vpop.f32.mrf.mxu0
    %v220 = vadd.f32 0.0, %v219
    %v221 = vpop.f32.mrf.mxu0
    %v222 = vpop.f32.mrf.mxu0
    %v223 = vadd.f32 0.0, %v222
    %v224 = vpop.f32.mrf.mxu0
    %225 = vmatprep.mubr.bf16.mxu0 0
    %226 = vmatmul.mubr.bf16.gmra.mxu0 %v100
    %v227 = vpop.f32.mrf.mxu0
    %v228 = vadd.f32 0.0, %v227
    %v229 = vpop.f32.mrf.mxu0
    %v230 = vpop.f32.mrf.mxu0
    %v231 = vadd.f32 0.0, %v230
    %v232 = vpop.f32.mrf.mxu0
    %233 = vmatprep.mubr.bf16.mxu0 0
    %234 = vmatmul.mubr.bf16.gmra.mxu0 %v101
    %v235 = vpop.f32.mrf.mxu0
    %v236 = vadd.f32 0.0, %v235
    %v237 = vpop.f32.mrf.mxu0
    %v238 = vpop.f32.mrf.mxu0
    %v239 = vadd.f32 0.0, %v238
    %v240 = vpop.f32.mrf.mxu0
    %241 = vmatprep.mubr.bf16.mxu0 0
    %242 = vmatmul.mubr.bf16.gmra.mxu0 %v102
    %v243 = vpop.f32.mrf.mxu0
    %v244 = vadd.f32 0.0, %v243
    %v245 = vpop.f32.mrf.mxu0
    %v246 = vpop.f32.mrf.mxu0
    %v247 = vadd.f32 0.0, %v246
    %v248 = vpop.f32.mrf.mxu0
    %249 = vmatprep.mubr.bf16.mxu0 0
    %250 = vmatmul.mubr.bf16.gmra.mxu0 %v103
    %v251 = vpop.f32.mrf.mxu0
    %v252 = vadd.f32 0.0, %v251
    %v253 = vpop.f32.mrf.mxu0
    %v254 = vpop.f32.mrf.mxu0
    %v255 = vadd.f32 0.0, %v254
    %v256 = vpop.f32.mrf.mxu0
    %257 = vmatprep.mubr.bf16.mxu0 0
    %258 = vmatmul.mubr.bf16.gmra.mxu0 %v104
    %v259 = vpop.f32.mrf.mxu0
    %v260 = vadd.f32 0.0, %v259
    %v261 = vpop.f32.mrf.mxu0
    %v262 = vpop.f32.mrf.mxu0
    %v263 = vadd.f32 0.0, %v262
    %v264 = vpop.f32.mrf.mxu0
    %265 = vdwg.mxu0
    %v266 = vadd.f32 %v77, %v204
    %v267 = vadd.f32 %v78, %v207
    %v268 = vadd.f32 %v79, %v212
    %v269 = vadd.f32 %v80, %v215
    %v270 = vadd.f32 %v81, %v220
    %v271 = vadd.f32 %v82, %v223
    %v272 = vadd.f32 %v83, %v228
    %v273 = vadd.f32 %v84, %v231
    %v274 = vadd.f32 %v85, %v236
    %v275 = vadd.f32 %v86, %v239
    %v276 = vadd.f32 %v87, %v244
    %v277 = vadd.f32 %v88, %v247
    %v278 = vadd.f32 %v89, %v252
    %v279 = vadd.f32 %v90, %v255
    %v280 = vadd.f32 %v91, %v260
    %v281 = vadd.f32 %v92, %v263
    %282 = vst [vmem:[#allocation2] sm:$0xff] %v266
    %283 = vst [vmem:[#allocation2 + $0x8] sm:$0xff] %v267
    %284 = vst [vmem:[#allocation2 + $0x10] sm:$0xff] %v268
    %285 = vst [vmem:[#allocation2 + $0x18] sm:$0xff] %v269
    %286 = vst [vmem:[#allocation2 + $0x20] sm:$0xff] %v270
    %287 = vst [vmem:[#allocation2 + $0x28] sm:$0xff] %v271
    %288 = vst [vmem:[#allocation2 + $0x30] sm:$0xff] %v272
    %289 = vst [vmem:[#allocation2 + $0x38] sm:$0xff] %v273
    %290 = vst [vmem:[#allocation2 + $0x40] sm:$0xff] %v274
    %291 = vst [vmem:[#allocation2 + $0x48] sm:$0xff] %v275
    %292 = vst [vmem:[#allocation2 + $0x50] sm:$0xff] %v276
    %293 = vst [vmem:[#allocation2 + $0x58] sm:$0xff] %v277
    %294 = vst [vmem:[#allocation2 + $0x60] sm:$0xff] %v278
    %295 = vst [vmem:[#allocation2 + $0x68] sm:$0xff] %v279
    %296 = vst [vmem:[#allocation2 + $0x70] sm:$0xff] %v280
    %297 = vst [vmem:[#allocation2 + $0x78] sm:$0xff] %v281
    // Predicated region
    $region30: #{tpu_custom_call.1} parent=1 // pred_check
      %p298 = pneg %p57
    $region31: #{tpu_custom_call.1} parent=1 // pred_check_branch
      %300 = sbr.rel (%p298) target = $region33
    $region32: #{tpu_custom_call.1} parent=1 // pred_region
      %v301 = vld [vmem:[#allocation2] sm:$0xff]
      %v302 = vld [vmem:[#allocation2 + $0x8] sm:$0xff]
      %v303 = vld [vmem:[#allocation2 + $0x10] sm:$0xff]
      %v304 = vld [vmem:[#allocation2 + $0x18] sm:$0xff]
      %v305 = vld [vmem:[#allocation2 + $0x20] sm:$0xff]
      %v306 = vld [vmem:[#allocation2 + $0x28] sm:$0xff]
      %v307 = vld [vmem:[#allocation2 + $0x30] sm:$0xff]
      %v308 = vld [vmem:[#allocation2 + $0x38] sm:$0xff]
      %v309 = vld [vmem:[#allocation2 + $0x40] sm:$0xff]
      %v310 = vld [vmem:[#allocation2 + $0x48] sm:$0xff]
      %v311 = vld [vmem:[#allocation2 + $0x50] sm:$0xff]
      %v312 = vld [vmem:[#allocation2 + $0x58] sm:$0xff]
      %v313 = vld [vmem:[#allocation2 + $0x60] sm:$0xff]
      %v314 = vld [vmem:[#allocation2 + $0x68] sm:$0xff]
      %v315 = vld [vmem:[#allocation2 + $0x70] sm:$0xff]
      %v316 = vld [vmem:[#allocation2 + $0x78] sm:$0xff]
      %v317 = vmax.f32 %v301, 0.0
      %v318 = vmax.f32 %v302, 0.0
      %v319 = vmax.f32 %v303, 0.0
      %v320 = vmax.f32 %v304, 0.0
      %v321 = vmax.f32 %v305, 0.0
      %v322 = vmax.f32 %v306, 0.0
      %v323 = vmax.f32 %v307, 0.0
      %v324 = vmax.f32 %v308, 0.0
      %v325 = vmax.f32 %v309, 0.0
      %v326 = vmax.f32 %v310, 0.0
      %v327 = vmax.f32 %v311, 0.0
      %v328 = vmax.f32 %v312, 0.0
      %v329 = vmax.f32 %v313, 0.0
      %v330 = vmax.f32 %v314, 0.0
      %v331 = vmax.f32 %v315, 0.0
      %v332 = vmax.f32 %v316, 0.0
      %v333 = vld [vmem:[#allocation8] sm:$0xff]
      %v334 = vld [vmem:[#allocation8 + $0x8] sm:$0xff]
      %v335 = vld [vmem:[#allocation8 + $0x10] sm:$0xff]
      %v336 = vld [vmem:[#allocation8 + $0x18] sm:$0xff]
      %v337 = vld [vmem:[#allocation8 + $0x20] sm:$0xff]
      %v338 = vld [vmem:[#allocation8 + $0x28] sm:$0xff]
      %v339 = vld [vmem:[#allocation8 + $0x30] sm:$0xff]
      %v340 = vld [vmem:[#allocation8 + $0x38] sm:$0xff]
      %v341 = vld [vmem:[#allocation8 + $0x40] sm:$0xff]
      %v342 = vld [vmem:[#allocation8 + $0x48] sm:$0xff]
      %v343 = vld [vmem:[#allocation8 + $0x50] sm:$0xff]
      %v344 = vld [vmem:[#allocation8 + $0x58] sm:$0xff]
      %v345 = vld [vmem:[#allocation8 + $0x60] sm:$0xff]
      %v346 = vld [vmem:[#allocation8 + $0x68] sm:$0xff]
      %v347 = vld [vmem:[#allocation8 + $0x70] sm:$0xff]
      %v348 = vld [vmem:[#allocation8 + $0x78] sm:$0xff]
      %v349 = vadd.f32 %v317, %v333
      %v350 = vadd.f32 %v318, %v334
      %v351 = vadd.f32 %v319, %v335
      %v352 = vadd.f32 %v320, %v336
      %v353 = vadd.f32 %v321, %v337
      %v354 = vadd.f32 %v322, %v338
      %v355 = vadd.f32 %v323, %v339
      %v356 = vadd.f32 %v324, %v340
      %v357 = vadd.f32 %v325, %v341
      %v358 = vadd.f32 %v326, %v342
      %v359 = vadd.f32 %v327, %v343
      %v360 = vadd.f32 %v328, %v344
      %v361 = vadd.f32 %v329, %v345
      %v362 = vadd.f32 %v330, %v346
      %v363 = vadd.f32 %v331, %v347
      %v364 = vadd.f32 %v332, %v348
      %365 = vst [vmem:[#allocation9] sm:$0xff] %v349
      %366 = vst [vmem:[#allocation9 + $0x8] sm:$0xff] %v350
      %367 = vst [vmem:[#allocation9 + $0x10] sm:$0xff] %v351
      %368 = vst [vmem:[#allocation9 + $0x18] sm:$0xff] %v352
      %369 = vst [vmem:[#allocation9 + $0x20] sm:$0xff] %v353
      %370 = vst [vmem:[#allocation9 + $0x28] sm:$0xff] %v354
      %371 = vst [vmem:[#allocation9 + $0x30] sm:$0xff] %v355
      %372 = vst [vmem:[#allocation9 + $0x38] sm:$0xff] %v356
      %373 = vst [vmem:[#allocation9 + $0x40] sm:$0xff] %v357
      %374 = vst [vmem:[#allocation9 + $0x48] sm:$0xff] %v358
      %375 = vst [vmem:[#allocation9 + $0x50] sm:$0xff] %v359
      %376 = vst [vmem:[#allocation9 + $0x58] sm:$0xff] %v360
      %377 = vst [vmem:[#allocation9 + $0x60] sm:$0xff] %v361
      %378 = vst [vmem:[#allocation9 + $0x68] sm:$0xff] %v362
      %379 = vst [vmem:[#allocation9 + $0x70] sm:$0xff] %v363
      %380 = vst [vmem:[#allocation9 + $0x78] sm:$0xff] %v364
    $region33: #{tpu_custom_call.1} parent=1 // pred_fallthru
      _
    // Predicated region
    $region34: #{tpu_custom_call.1} parent=1 // pred_check
      _
    $region35: #{tpu_custom_call.1} parent=1 // pred_check_branch
      %382 = sbr.rel (0) target = $region37
    $region36: #{tpu_custom_call.1} parent=1 // pred_region
      %s384 = ssub.s32 2048, 2048
      %385 = vsyncadd [#allocation5], %s384
      %s386 = sshll.u32 [#allocation9], 4
      %s387 = int_to_ptr.vmem [resolvable:$true] %s386
      %392 = dma.vmem_to_hbm [thread:$0]  %s387, 2048, %s3, [#allocation5], 128, 128, 8
    $region37: #{tpu_custom_call.1} parent=1 // pred_fallthru
      _
    // Predicated region
    $region38: #{tpu_custom_call.1} parent=1 // pred_check
      _
    $region39: #{tpu_custom_call.1} parent=1 // pred_check_branch
      %394 = sbr.rel (0) target = $region41
    $region40: #{tpu_custom_call.1} parent=1 // pred_region
      %395 = dma.done [#allocation5], 2048
    $region41: #{tpu_custom_call.1} parent=1 // pred_fallthru
      _
    %396 = vsyncpa [#allocation4], 1
    %397 = vsyncpa [#allocation7], 1
    %398 = vsyncpa [#allocation5], 1

</llo_original>
